<compile_context>
chip_gen: v7x
topology: tpu7x:2x2x1
jax: 0.10.0
libtpu: 0.0.40
codegen_flags: <defaults>
</compile_context>

<pallas_src>
import functools

import numpy as np

import jax
import jax.numpy as jnp
from jax.experimental import pallas as pl
from jax.experimental.pallas import tpu as pltpu


def _round_up(x, m):
    return (x + m - 1) // m * m


def _vmem_budget_bytes():
    """Half the chip's physical VMEM (v5e/v6e: 64 MiB, v7x: 32 MiB)."""
    cap = 128 << 20
    try:
        cap = int(getattr(pltpu.get_tpu_info(), "vmem_capacity_bytes", cap))
    except Exception:
        pass
    return max(16 << 20, min(cap // 2, 64 << 20))


def _act_dtype(compute_dtype):
    """tanh precision for the big activation: bf16 on v6e/v7x, f32 on v5*."""
    try:
        kind = jax.devices()[0].device_kind.lower()
    except Exception:
        kind = ""
    return jnp.float32 if "v5" in kind else compute_dtype


def _select_batch_tile(batch, t_p, hg, x_itemsize, vmem_budget):
    """Batch tile: fill the MXU M dim (bt*T >= 256), MiB-scale streamed x
    tiles, capped f32 `hidden`, all under the chip's VMEM budget, and >= 2
    grid steps when the batch allows it (both v7x TensorCores)."""
    if batch <= 0:
        return 1
    stream_row = t_p * hg * x_itemsize        # streamed x bytes per batch row
    hidden_row = t_p * hg * 4                 # f32 hidden intermediate per row
    compute_row = t_p * hg * 2                # bf16 working copy per row

    bt = max(1, pl.cdiv(256, t_p))                                # MXU M >= 256
    bt = max(bt, (2 << 20) // max(stream_row, 1))                 # ~2 MiB tile
    bt = min(bt, max(1, (8 << 20) // max(hidden_row, 1)))         # cap hidden
    per_row = 2 * stream_row + hidden_row + compute_row           # 2x-buffered x
    bt = min(bt, max(1, (vmem_budget // 3) // max(per_row, 1)))   # VMEM budget

    if bt >= batch:
        if batch >= 16:           # split so both v7x TensorCores get work
            return _round_up(pl.cdiv(batch, 2), 8)
        return batch
    return max(8, bt // 8 * 8)    # multiple of 8 keeps sublane tiling legal


def _attentive_pooling_kernel(x_ref, mask_ref, w1_ref, b1_ref, w2_ref, b2_ref,
                              wm_ref, bm_ref, out_ref, *, compute_dtype,
                              act_dtype):
    """Attentive pooling over tokens + mapping fn for one batch tile.

    x_ref    : (Bt, T, Hg)  streamed encoder outputs (incoming dtype)
    mask_ref : (Bt, T)  f32   1.0 = valid token
    w1_ref   : (Hg, Hg) bf16  attn Linear1 weight
    b1_ref   : (1, Hg)  f32   attn Linear1 bias
    w2_ref   : (1, Hg)  f32   attn Linear2 weight (row vector)
    b2_ref   : (1, 1)   f32   attn Linear2 bias (SMEM scalar)
    wm_ref   : (Hg, Hl) bf16  mapping Linear weight
    bm_ref   : (1, Hl)  f32   mapping Linear bias
    out_ref  : (Bt, Hl)       h0 tile
    """
    bt, t, hg = x_ref.shape
    x = x_ref[...]                                        # (Bt, T, Hg)

    # --- attention scores: Linear2(tanh(Linear1(x))) -------------------------
    # T is sublane-aligned for the streamed dtype, so the (Bt*T, Hg) collapse
    # (and the f32 expand below) are pure views, not relayouts.
    x2 = x.reshape(bt * t, hg).astype(compute_dtype)
    h = (jnp.dot(x2, w1_ref[...], preferred_element_type=jnp.float32)
         + b1_ref[...]).reshape(bt, t, hg)                # f32
    h = jnp.tanh(h.astype(act_dtype))                     # bf16 EUP on v6e/v7x
    # (., 1) matmul replaced by a VPU multiply + lane reduce (f32 accumulate).
    e = jnp.sum(h * w2_ref[...], axis=-1) + b2_ref[0, 0]  # (Bt, T) f32

    # --- masked softmax over tokens (f32; finite fill keeps all-pad rows
    #     NaN-free; approx reciprocal rides the EUP slot) ----------------------
    e = jnp.where(mask_ref[...] > 0.0, e, -1e20)
    e = e - jnp.max(e, axis=-1, keepdims=True)
    p = jnp.exp(e)
    a = p * pl.reciprocal(jnp.sum(p, axis=-1, keepdims=True), approx=True)

    # --- weighted pooling: cast the weights (not the x tile), token sum
    #     accumulated in f32 ---------------------------------------------------
    a_c = a.astype(x.dtype)                               # (Bt, T)
    pooled = jnp.sum(a_c[:, :, None] * x, axis=1, dtype=jnp.float32)  # (Bt, Hg)

    # --- mapping function: tanh(pooled @ Wm + bm) -----------------------------
    h0 = jnp.tanh(jnp.dot(pooled.astype(compute_dtype), wm_ref[...],
                          preferred_element_type=jnp.float32) + bm_ref[...])
    out_ref[...] = h0.astype(out_ref.dtype)


def encoder2decoder_pallas(encodings, mask, params, *, batch_tile=None,
                           compute_dtype=jnp.bfloat16, out_dtype=None):
    """PoolingFunction(gnn_hidden, lstm_hidden, method='attentive-pooling').

    Streams the encodings directly (no host pad+cast HBM pass), tiles only the
    batch dimension, and auto-sizes the batch tile per TPU generation.  Set
    out_dtype=jnp.bfloat16 if the downstream decoder consumes bf16.
    """
    B, T, Hg = encodings.shape
    Hl = params["wm"].shape[1]
    f32 = jnp.float32
    out_dtype = encodings.dtype if out_dtype is None else out_dtype
    act_dtype = _act_dtype(compute_dtype)
    vmem_budget = _vmem_budget_bytes()

    # Fast path: encodings streamed untouched.  Only when the token axis is
    # not sublane-aligned for the incoming dtype do we pad it (zero-masked).
    itemsize = encodings.dtype.itemsize
    sublane = max(8, 32 // max(itemsize, 1))
    t_p = _round_up(T, sublane)
    x = encodings
    m = mask.astype(f32)
    if t_p != T:
        x = jnp.zeros((B, t_p, Hg), encodings.dtype).at[:, :T, :].set(encodings)
        m = jnp.zeros((B, t_p), f32).at[:, :T].set(m)

    bt = batch_tile if batch_tile is not None else _select_batch_tile(
        B, t_p, Hg, itemsize, vmem_budget)
    if bt < B:
        bt = max(8, bt // 8 * 8)      # multiple of 8: legal sublane tiling
    if bt >= B:
        bt = B                        # single tile: block dims == array dims
    grid = (pl.cdiv(B, bt),)          # ragged last batch block is fine

    # Small weights: cast once on the host (negligible next to the encodings).
    w1 = params["w1"].astype(compute_dtype)
    b1 = params["b1"].reshape(1, Hg).astype(f32)
    w2 = params["w2"].reshape(1, Hg).astype(f32)
    b2 = params["b2"].reshape(1, 1).astype(f32)
    wm = params["wm"].astype(compute_dtype)
    bm = params["bm"].reshape(1, Hl).astype(f32)

    cost = pl.CostEstimate(
        flops=int(2 * B * t_p * Hg * Hg + 2 * B * t_p * Hg + 2 * B * Hg * Hl),
        transcendentals=int(B * t_p * Hg + 2 * B * t_p + B * Hl),
        bytes_accessed=int(B * t_p * Hg * itemsize + B * t_p * 4
                           + (Hg * Hg + Hg * Hl) * 2 + (2 * Hg + Hl + 1) * 4
                           + B * Hl * np.dtype(out_dtype).itemsize))

    kernel = functools.partial(_attentive_pooling_kernel,
                               compute_dtype=compute_dtype, act_dtype=act_dtype)

    def build(single_buffer_weights):
        def wspec(shape):
            kwargs = ({"pipeline_mode": pl.Buffered(1)}
                      if single_buffer_weights else {})
            return pl.BlockSpec(shape, lambda i: (0,) * len(shape), **kwargs)

        return pl.pallas_call(
            kernel,
            out_shape=jax.ShapeDtypeStruct((B, Hl), out_dtype),
            grid_spec=pltpu.PrefetchScalarGridSpec(
                num_scalar_prefetch=0,
                grid=grid,
                in_specs=[
                    # streamed per batch tile (double-buffered by Pallas)
                    pl.BlockSpec((bt, t_p, Hg), lambda i: (i, 0, 0)),
                    pl.BlockSpec((bt, t_p), lambda i: (i, 0)),
                    # weights: constant block index -> fetched once, resident
                    wspec((Hg, Hg)),
                    wspec((1, Hg)),
                    wspec((1, Hg)),
                    # scalar bias in SMEM (no padded VMEM tile / DMA slot)
                    pl.BlockSpec(memory_space=pltpu.MemorySpace.SMEM),
                    wspec((Hg, Hl)),
                    wspec((1, Hl)),
                ],
                out_specs=pl.BlockSpec((bt, Hl), lambda i: (i, 0)),
            ),
            compiler_params=pltpu.CompilerParams(
                dimension_semantics=("parallel",),   # megacore batch split
                vmem_limit_bytes=int(vmem_budget)),
            cost_estimate=cost,
        )

    operands = (x, m, w1, b1, w2, b2, wm, bm)
    try:
        return build(single_buffer_weights=True)(*operands)
    except Exception:
        # pl.Buffered(1) (single-buffered resident weights) not supported on
        # this JAX build; fall back to default double-buffered weight blocks.
        return build(single_buffer_weights=False)(*operands)


def make_bridge_params(key, gnn_hidden, lstm_hidden):
    """Deterministic parameter init for the PoolingFunction bridge."""
    k1, k2, k3, k4, k5, k6 = jax.random.split(key, 6)
    s = 0.05
    return {
        # attn = Sequential(Linear(Hg, Hg), Tanh(), Linear(Hg, 1))
        "w1": s * jax.random.normal(k1, (gnn_hidden, gnn_hidden), jnp.float32),
        "b1": s * jax.random.normal(k2, (1, gnn_hidden), jnp.float32),
        "w2": s * jax.random.normal(k3, (gnn_hidden, 1), jnp.float32),
        "b2": s * jax.random.normal(k4, (1, 1), jnp.float32),
        # mapping_function = Sequential(Linear(Hg, Hl), Tanh())
        "wm": s * jax.random.normal(k5, (gnn_hidden, lstm_hidden), jnp.float32),
        "bm": s * jax.random.normal(k6, (1, lstm_hidden), jnp.float32),
    }


def encoder2decoder_ref(encodings, mask, params, compute_dtype=jnp.bfloat16):
    """Pure-JAX reference in the kernel's mixed precision (correctness check)."""
    f32 = jnp.float32
    act_dtype = _act_dtype(compute_dtype)
    x = encodings.astype(compute_dtype)
    h = (jnp.dot(x, params["w1"].astype(compute_dtype),
                 preferred_element_type=f32)
         + params["b1"].reshape(-1))
    h = jnp.tanh(h.astype(act_dtype))
    e = (jnp.sum(h * params["w2"].reshape(-1), axis=-1)
         + params["b2"].reshape(()))
    e = jnp.where(mask.astype(f32) > 0.0, e, -1e20)
    a = jax.nn.softmax(e, axis=-1)
    pooled = jnp.einsum("bt,bth->bh", a, encodings.astype(f32))
    return jnp.tanh(jnp.dot(pooled.astype(compute_dtype),
                            params["wm"].astype(compute_dtype),
                            preferred_element_type=f32)
                    + params["bm"].reshape(-1))


class Text2SQL:
    """JAX/Pallas mirror of the Text2SQL composition.

    forward(batch) == (loss, gp_loss) in the original; the encoder and decoder
    sub-networks are not translated (see TODO at top), so forward exposes the
    bridge computation h0 = encoder2decoder(encodings, mask).
    """

    def __init__(self, gnn_hidden_size, lstm_hidden_size, key):
        self.params = make_bridge_params(key, gnn_hidden_size, lstm_hidden_size)

    def forward(self, encodings, mask):
        # TODO(synk): encodings/mask come from the LGESQL encoder;
        # decoder.score(encodings, mask, h0, batch) is not translated.
        return encoder2decoder_pallas(encodings, mask, self.params)


if __name__ == "__main__":
    key = jax.random.PRNGKey(0)
    k_enc, k_par = jax.random.split(key)

    B, T = 2, 8                 # batch, number of graph nodes / tokens
    GNN_HIDDEN = 32             # args.gnn_hidden_size
    LSTM_HIDDEN = 64            # args.lstm_hidden_size

    encodings = jax.random.normal(k_enc, (B, T, GNN_HIDDEN), jnp.float32)
    # valid lengths per example: [8, 5]
    lengths = jnp.array([8, 5], dtype=jnp.int32)
    mask = (jnp.arange(T)[None, :] < lengths[:, None]).astype(jnp.float32)

    model = Text2SQL(GNN_HIDDEN, LSTM_HIDDEN, k_par)

    h0 = model.forward(encodings, mask)
    h0 = jax.block_until_ready(h0)

    ref = encoder2decoder_ref(encodings, mask, model.params)
    assert h0.shape == (B, LSTM_HIDDEN)
    assert jnp.allclose(h0, ref, atol=2e-2, rtol=2e-2), "Pallas != reference"

    print("KERNEL_OK")
</pallas_src>

<mosaic_0001>
module attributes {stable_mosaic.version = 11 : i64} {
  func.func @_attentive_pooling_kernel(%arg0: i32, %arg1: memref<2x8x32xf32, #tpu.memory_space<vmem>>, %arg2: memref<2x8xf32, #tpu.memory_space<vmem>>, %arg3: memref<32x32xbf16, #tpu.memory_space<vmem>>, %arg4: memref<1x32xf32, #tpu.memory_space<vmem>>, %arg5: memref<1x32xf32, #tpu.memory_space<vmem>>, %arg6: memref<1x1xf32, #tpu.memory_space<smem>>, %arg7: memref<32x64xbf16, #tpu.memory_space<vmem>>, %arg8: memref<1x64xf32, #tpu.memory_space<vmem>>, %arg9: memref<2x64xf32, #tpu.memory_space<vmem>>) attributes {dimension_semantics = [#tpu.dimension_semantics<parallel>], iteration_bounds = array<i64: 1>, scalar_prefetch = 0 : i64, scratch_operands = 0 : i64, tpu.core_type = #tpu.core_type<tc>, window_params = [{transform_indices = @transform_0, window_bounds = array<i64: 2, 8, 32>}, {transform_indices = @transform_1, window_bounds = array<i64: 2, 8>}, {pipeline_mode = #tpu.pipeline_mode<synchronous>, transform_indices = @transform_2, window_bounds = array<i64: 32, 32>}, {pipeline_mode = #tpu.pipeline_mode<synchronous>, transform_indices = @transform_3, window_bounds = array<i64: 1, 32>}, {pipeline_mode = #tpu.pipeline_mode<synchronous>, transform_indices = @transform_4, window_bounds = array<i64: 1, 32>}, {transform_indices = @transform_5, window_bounds = array<i64: 1, 1>}, {pipeline_mode = #tpu.pipeline_mode<synchronous>, transform_indices = @transform_6, window_bounds = array<i64: 32, 64>}, {pipeline_mode = #tpu.pipeline_mode<synchronous>, transform_indices = @transform_7, window_bounds = array<i64: 1, 64>}, {transform_indices = @transform_8, window_bounds = array<i64: 2, 64>}]} {
    %c0 = arith.constant 0 : index
    %c0_0 = arith.constant 0 : index
    %c0_1 = arith.constant 0 : index
    %0 = vector.load %arg1[%c0, %c0_0, %c0_1] : memref<2x8x32xf32, #tpu.memory_space<vmem>>, vector<2x8x32xf32>
    %1 = vector.shape_cast %0 : vector<2x8x32xf32> to vector<16x32xf32>
    %2 = arith.truncf %1 : vector<16x32xf32> to vector<16x32xbf16>
    %c0_2 = arith.constant 0 : index
    %c0_3 = arith.constant 0 : index
    %3 = vector.load %arg3[%c0_2, %c0_3] : memref<32x32xbf16, #tpu.memory_space<vmem>>, vector<32x32xbf16>
    %cst = arith.constant dense<0.000000e+00> : vector<16x32xf32>
    %4 = tpu.matmul %2, %3, %cst {dimension_numbers = #tpu.dot_dimension_numbers<[1], [0], [0], [1], [0, 0, 1, 1], [], []>} : vector<16x32xbf16>, vector<32x32xbf16>, vector<16x32xf32> -> vector<16x32xf32>
    %c0_4 = arith.constant 0 : index
    %c0_5 = arith.constant 0 : index
    %5 = vector.load %arg4[%c0_4, %c0_5] : memref<1x32xf32, #tpu.memory_space<vmem>>, vector<1x32xf32>
    %6 = vector.broadcast %5 : vector<1x32xf32> to vector<16x32xf32>
    %7 = arith.addf %4, %6 : vector<16x32xf32>
    %8 = vector.shape_cast %7 : vector<16x32xf32> to vector<2x8x32xf32>
    %9 = arith.truncf %8 : vector<2x8x32xf32> to vector<2x8x32xbf16>
    %10 = math.tanh %9 : vector<2x8x32xbf16>
    %c0_6 = arith.constant 0 : index
    %c0_7 = arith.constant 0 : index
    %11 = vector.load %arg5[%c0_6, %c0_7] : memref<1x32xf32, #tpu.memory_space<vmem>>, vector<1x32xf32>
    %12 = arith.extf %10 : vector<2x8x32xbf16> to vector<2x8x32xf32>
    %13 = vector.shape_cast %11 : vector<1x32xf32> to vector<1x1x32xf32>
    %14 = vector.broadcast %13 : vector<1x1x32xf32> to vector<2x8x32xf32>
    %15 = arith.mulf %12, %14 : vector<2x8x32xf32>
    %cst_8 = arith.constant dense<0.000000e+00> : vector<2x8xf32>
    %16 = vector.multi_reduction <add>, %15, %cst_8 [2] : vector<2x8x32xf32> to vector<2x8xf32>
    %c0_9 = arith.constant 0 : index
    %c0_10 = arith.constant 0 : index
    %17 = memref.load %arg6[%c0_9, %c0_10] : memref<1x1xf32, #tpu.memory_space<smem>>
    %18 = vector.broadcast %17 : f32 to vector<2x8xf32>
    %19 = arith.addf %16, %18 : vector<2x8xf32>
    %c0_11 = arith.constant 0 : index
    %c0_12 = arith.constant 0 : index
    %20 = vector.load %arg2[%c0_11, %c0_12] : memref<2x8xf32, #tpu.memory_space<vmem>>, vector<2x8xf32>
    %cst_13 = arith.constant 0.000000e+00 : f32
    %21 = vector.broadcast %cst_13 : f32 to vector<2x8xf32>
    %22 = arith.cmpf ogt, %20, %21 : vector<2x8xf32>
    %cst_14 = arith.constant -1.000000e+20 : f32
    %23 = vector.broadcast %cst_14 : f32 to vector<2x8xf32>
    %24 = arith.select %22, %19, %23 : vector<2x8xi1>, vector<2x8xf32>
    %cst_15 = arith.constant dense<0xFF800000> : vector<2xf32>
    %25 = vector.multi_reduction <maximumf>, %24, %cst_15 [1] : vector<2x8xf32> to vector<2xf32>
    %26 = vector.shape_cast %25 : vector<2xf32> to vector<2x1xf32>
    %27 = vector.broadcast %26 : vector<2x1xf32> to vector<2x8xf32>
    %28 = arith.subf %24, %27 : vector<2x8xf32>
    %29 = math.exp %28 : vector<2x8xf32>
    %cst_16 = arith.constant dense<0.000000e+00> : vector<2xf32>
    %30 = vector.multi_reduction <add>, %29, %cst_16 [1] : vector<2x8xf32> to vector<2xf32>
    %31 = vector.shape_cast %30 : vector<2xf32> to vector<2x1xf32>
    %32 = tpu.reciprocal %31 {approx = true} : vector<2x1xf32> -> vector<2x1xf32>
    %33 = vector.broadcast %32 : vector<2x1xf32> to vector<2x8xf32>
    %34 = arith.mulf %29, %33 : vector<2x8xf32>
    %35 = vector.shape_cast %34 : vector<2x8xf32> to vector<2x8x1xf32>
    %36 = vector.broadcast %35 : vector<2x8x1xf32> to vector<2x8x32xf32>
    %37 = arith.mulf %36, %0 : vector<2x8x32xf32>
    %cst_17 = arith.constant dense<0.000000e+00> : vector<2x32xf32>
    %38 = vector.multi_reduction <add>, %37, %cst_17 [1] : vector<2x8x32xf32> to vector<2x32xf32>
    %39 = arith.truncf %38 : vector<2x32xf32> to vector<2x32xbf16>
    %c0_18 = arith.constant 0 : index
    %c0_19 = arith.constant 0 : index
    %40 = vector.load %arg7[%c0_18, %c0_19] : memref<32x64xbf16, #tpu.memory_space<vmem>>, vector<32x64xbf16>
    %cst_20 = arith.constant dense<0.000000e+00> : vector<2x64xf32>
    %41 = tpu.matmul %39, %40, %cst_20 {dimension_numbers = #tpu.dot_dimension_numbers<[1], [0], [0], [1], [0, 0, 1, 1], [], []>} : vector<2x32xbf16>, vector<32x64xbf16>, vector<2x64xf32> -> vector<2x64xf32>
    %c0_21 = arith.constant 0 : index
    %c0_22 = arith.constant 0 : index
    %42 = vector.load %arg8[%c0_21, %c0_22] : memref<1x64xf32, #tpu.memory_space<vmem>>, vector<1x64xf32>
    %43 = vector.broadcast %42 : vector<1x64xf32> to vector<2x64xf32>
    %44 = arith.addf %41, %43 : vector<2x64xf32>
    %45 = math.tanh %44 : vector<2x64xf32>
    %c0_23 = arith.constant 0 : index
    %c0_24 = arith.constant 0 : index
    %46 = vector.load %arg9[%c0_23, %c0_24] : memref<2x64xf32, #tpu.memory_space<vmem>>, vector<2x64xf32>
    tpu.vector_store %arg9[%c0_23, %c0_24], %45 {strides = array<i32>} : memref<2x64xf32, #tpu.memory_space<vmem>>, vector<2x64xf32>,
    return
  }
  func.func @transform_0(%arg0: i32) -> (i32, i32, i32) {
    %c0_i32 = arith.constant 0 : i32
    %c0_i32_0 = arith.constant 0 : i32
    %c0_i32_1 = arith.constant 0 : i32
    return %arg0, %c0_i32, %c0_i32_0 : i32, i32, i32
  }
  func.func @transform_1(%arg0: i32) -> (i32, i32) {
    %c0_i32 = arith.constant 0 : i32
    %c0_i32_0 = arith.constant 0 : i32
    return %arg0, %c0_i32 : i32, i32
  }
  func.func @transform_2(%arg0: i32) -> (i32, i32) {
    %c0_i32 = arith.constant 0 : i32
    %c0_i32_0 = arith.constant 0 : i32
    %c0_i32_1 = arith.constant 0 : i32
    return %c0_i32, %c0_i32_0 : i32, i32
  }
  func.func @transform_3(%arg0: i32) -> (i32, i32) {
    %c0_i32 = arith.constant 0 : i32
    %c0_i32_0 = arith.constant 0 : i32
    %c0_i32_1 = arith.constant 0 : i32
    return %c0_i32, %c0_i32_0 : i32, i32
  }
  func.func @transform_4(%arg0: i32) -> (i32, i32) {
    %c0_i32 = arith.constant 0 : i32
    %c0_i32_0 = arith.constant 0 : i32
    %c0_i32_1 = arith.constant 0 : i32
    return %c0_i32, %c0_i32_0 : i32, i32
  }
  func.func @transform_5(%arg0: i32) -> (i32, i32) {
    %c0_i32 = arith.constant 0 : i32
    %c0_i32_0 = arith.constant 0 : i32
    %c0_i32_1 = arith.constant 0 : i32
    return %c0_i32, %c0_i32_0 : i32, i32
  }
  func.func @transform_6(%arg0: i32) -> (i32, i32) {
    %c0_i32 = arith.constant 0 : i32
    %c0_i32_0 = arith.constant 0 : i32
    %c0_i32_1 = arith.constant 0 : i32
    return %c0_i32, %c0_i32_0 : i32, i32
  }
  func.func @transform_7(%arg0: i32) -> (i32, i32) {
    %c0_i32 = arith.constant 0 : i32
    %c0_i32_0 = arith.constant 0 : i32
    %c0_i32_1 = arith.constant 0 : i32
    return %c0_i32, %c0_i32_0 : i32, i32
  }
  func.func @transform_8(%arg0: i32) -> (i32, i32) {
    %c0_i32 = arith.constant 0 : i32
    %c0_i32_0 = arith.constant 0 : i32
    return %arg0, %c0_i32 : i32, i32
  }
}

module attributes {stable_mosaic.version = 11 : i64} {
  func.func @_attentive_pooling_kernel(%arg0: i32, %arg1: memref<2x8x32xf32, #tpu.memory_space<vmem>>, %arg2: memref<2x8xf32, #tpu.memory_space<vmem>>, %arg3: memref<32x32xbf16, #tpu.memory_space<vmem>>, %arg4: memref<1x32xf32, #tpu.memory_space<vmem>>, %arg5: memref<1x32xf32, #tpu.memory_space<vmem>>, %arg6: memref<1x1xf32, #tpu.memory_space<smem>>, %arg7: memref<32x64xbf16, #tpu.memory_space<vmem>>, %arg8: memref<1x64xf32, #tpu.memory_space<vmem>>, %arg9: memref<2x64xf32, #tpu.memory_space<vmem>>) attributes {dimension_semantics = [#tpu.dimension_semantics<parallel>], iteration_bounds = array<i64: 1>, scalar_prefetch = 0 : i64, scratch_operands = 0 : i64, tpu.core_type = #tpu.core_type<tc>, window_params = [{transform_indices = @transform_0, window_bounds = array<i64: 2, 8, 32>}, {transform_indices = @transform_1, window_bounds = array<i64: 2, 8>}, {pipeline_mode = #tpu.pipeline_mode<synchronous>, transform_indices = @transform_2, window_bounds = array<i64: 32, 32>}, {pipeline_mode = #tpu.pipeline_mode<synchronous>, transform_indices = @transform_3, window_bounds = array<i64: 1, 32>}, {pipeline_mode = #tpu.pipeline_mode<synchronous>, transform_indices = @transform_4, window_bounds = array<i64: 1, 32>}, {transform_indices = @transform_5, window_bounds = array<i64: 1, 1>}, {pipeline_mode = #tpu.pipeline_mode<synchronous>, transform_indices = @transform_6, window_bounds = array<i64: 32, 64>}, {pipeline_mode = #tpu.pipeline_mode<synchronous>, transform_indices = @transform_7, window_bounds = array<i64: 1, 64>}, {transform_indices = @transform_8, window_bounds = array<i64: 2, 64>}]} {
    %c0 = arith.constant 0 : index
    %c0_0 = arith.constant 0 : index
    %c0_1 = arith.constant 0 : index
    %0 = vector.load %arg1[%c0, %c0_0, %c0_1] : memref<2x8x32xf32, #tpu.memory_space<vmem>>, vector<2x8x32xf32>
    %1 = vector.shape_cast %0 : vector<2x8x32xf32> to vector<16x32xf32>
    %2 = arith.truncf %1 : vector<16x32xf32> to vector<16x32xbf16>
    %c0_2 = arith.constant 0 : index
    %c0_3 = arith.constant 0 : index
    %3 = vector.load %arg3[%c0_2, %c0_3] : memref<32x32xbf16, #tpu.memory_space<vmem>>, vector<32x32xbf16>
    %cst = arith.constant dense<0.000000e+00> : vector<16x32xf32>
    %4 = tpu.matmul %2, %3, %cst {dimension_numbers = #tpu.dot_dimension_numbers<[1], [0], [0], [1], [0, 0, 1, 1], [], []>} : vector<16x32xbf16>, vector<32x32xbf16>, vector<16x32xf32> -> vector<16x32xf32>
    %c0_4 = arith.constant 0 : index
    %c0_5 = arith.constant 0 : index
    %5 = vector.load %arg4[%c0_4, %c0_5] : memref<1x32xf32, #tpu.memory_space<vmem>>, vector<1x32xf32>
    %6 = vector.broadcast %5 : vector<1x32xf32> to vector<16x32xf32>
    %7 = arith.addf %4, %6 : vector<16x32xf32>
    %8 = vector.shape_cast %7 : vector<16x32xf32> to vector<2x8x32xf32>
    %9 = arith.truncf %8 : vector<2x8x32xf32> to vector<2x8x32xbf16>
    %10 = math.tanh %9 : vector<2x8x32xbf16>
    %c0_6 = arith.constant 0 : index
    %c0_7 = arith.constant 0 : index
    %11 = vector.load %arg5[%c0_6, %c0_7] : memref<1x32xf32, #tpu.memory_space<vmem>>, vector<1x32xf32>
    %12 = arith.extf %10 : vector<2x8x32xbf16> to vector<2x8x32xf32>
    %13 = vector.shape_cast %11 : vector<1x32xf32> to vector<1x1x32xf32>
    %14 = vector.broadcast %13 : vector<1x1x32xf32> to vector<2x8x32xf32>
    %15 = arith.mulf %12, %14 : vector<2x8x32xf32>
    %cst_8 = arith.constant dense<0.000000e+00> : vector<2x8xf32>
    %16 = vector.multi_reduction <add>, %15, %cst_8 [2] : vector<2x8x32xf32> to vector<2x8xf32>
    %c0_9 = arith.constant 0 : index
    %c0_10 = arith.constant 0 : index
    %17 = memref.load %arg6[%c0_9, %c0_10] : memref<1x1xf32, #tpu.memory_space<smem>>
    %18 = vector.broadcast %17 : f32 to vector<2x8xf32>
    %19 = arith.addf %16, %18 : vector<2x8xf32>
    %c0_11 = arith.constant 0 : index
    %c0_12 = arith.constant 0 : index
    %20 = vector.load %arg2[%c0_11, %c0_12] : memref<2x8xf32, #tpu.memory_space<vmem>>, vector<2x8xf32>
    %cst_13 = arith.constant 0.000000e+00 : f32
    %21 = vector.broadcast %cst_13 : f32 to vector<2x8xf32>
    %22 = arith.cmpf ogt, %20, %21 : vector<2x8xf32>
    %cst_14 = arith.constant -1.000000e+20 : f32
    %23 = vector.broadcast %cst_14 : f32 to vector<2x8xf32>
    %24 = arith.select %22, %19, %23 : vector<2x8xi1>, vector<2x8xf32>
    %cst_15 = arith.constant dense<0xFF800000> : vector<2xf32>
    %25 = vector.multi_reduction <maximumf>, %24, %cst_15 [1] : vector<2x8xf32> to vector<2xf32>
    %26 = vector.shape_cast %25 : vector<2xf32> to vector<2x1xf32>
    %27 = vector.broadcast %26 : vector<2x1xf32> to vector<2x8xf32>
    %28 = arith.subf %24, %27 : vector<2x8xf32>
    %29 = math.exp %28 : vector<2x8xf32>
    %cst_16 = arith.constant dense<0.000000e+00> : vector<2xf32>
    %30 = vector.multi_reduction <add>, %29, %cst_16 [1] : vector<2x8xf32> to vector<2xf32>
    %31 = vector.shape_cast %30 : vector<2xf32> to vector<2x1xf32>
    %32 = tpu.reciprocal %31 {approx = true} : vector<2x1xf32> -> vector<2x1xf32>
    %33 = vector.broadcast %32 : vector<2x1xf32> to vector<2x8xf32>
    %34 = arith.mulf %29, %33 : vector<2x8xf32>
    %35 = vector.shape_cast %34 : vector<2x8xf32> to vector<2x8x1xf32>
    %36 = vector.broadcast %35 : vector<2x8x1xf32> to vector<2x8x32xf32>
    %37 = arith.mulf %36, %0 : vector<2x8x32xf32>
    %cst_17 = arith.constant dense<0.000000e+00> : vector<2x32xf32>
    %38 = vector.multi_reduction <add>, %37, %cst_17 [1] : vector<2x8x32xf32> to vector<2x32xf32>
    %39 = arith.truncf %38 : vector<2x32xf32> to vector<2x32xbf16>
    %c0_18 = arith.constant 0 : index
    %c0_19 = arith.constant 0 : index
    %40 = vector.load %arg7[%c0_18, %c0_19] : memref<32x64xbf16, #tpu.memory_space<vmem>>, vector<32x64xbf16>
    %cst_20 = arith.constant dense<0.000000e+00> : vector<2x64xf32>
    %41 = tpu.matmul %39, %40, %cst_20 {dimension_numbers = #tpu.dot_dimension_numbers<[1], [0], [0], [1], [0, 0, 1, 1], [], []>} : vector<2x32xbf16>, vector<32x64xbf16>, vector<2x64xf32> -> vector<2x64xf32>
    %c0_21 = arith.constant 0 : index
    %c0_22 = arith.constant 0 : index
    %42 = vector.load %arg8[%c0_21, %c0_22] : memref<1x64xf32, #tpu.memory_space<vmem>>, vector<1x64xf32>
    %43 = vector.broadcast %42 : vector<1x64xf32> to vector<2x64xf32>
    %44 = arith.addf %41, %43 : vector<2x64xf32>
    %45 = math.tanh %44 : vector<2x64xf32>
    %c0_23 = arith.constant 0 : index
    %c0_24 = arith.constant 0 : index
    %46 = vector.load %arg9[%c0_23, %c0_24] : memref<2x64xf32, #tpu.memory_space<vmem>>, vector<2x64xf32>
    tpu.vector_store %arg9[%c0_23, %c0_24], %45 {strides = array<i32>} : memref<2x64xf32, #tpu.memory_space<vmem>>, vector<2x64xf32>,
    return
  }
  func.func @transform_0(%arg0: i32) -> (i32, i32, i32) {
    %c0_i32 = arith.constant 0 : i32
    %c0_i32_0 = arith.constant 0 : i32
    %c0_i32_1 = arith.constant 0 : i32
    return %arg0, %c0_i32, %c0_i32_0 : i32, i32, i32
  }
  func.func @transform_1(%arg0: i32) -> (i32, i32) {
    %c0_i32 = arith.constant 0 : i32
    %c0_i32_0 = arith.constant 0 : i32
    return %arg0, %c0_i32 : i32, i32
  }
  func.func @transform_2(%arg0: i32) -> (i32, i32) {
    %c0_i32 = arith.constant 0 : i32
    %c0_i32_0 = arith.constant 0 : i32
    %c0_i32_1 = arith.constant 0 : i32
    return %c0_i32, %c0_i32_0 : i32, i32
  }
  func.func @transform_3(%arg0: i32) -> (i32, i32) {
    %c0_i32 = arith.constant 0 : i32
    %c0_i32_0 = arith.constant 0 : i32
    %c0_i32_1 = arith.constant 0 : i32
    return %c0_i32, %c0_i32_0 : i32, i32
  }
  func.func @transform_4(%arg0: i32) -> (i32, i32) {
    %c0_i32 = arith.constant 0 : i32
    %c0_i32_0 = arith.constant 0 : i32
    %c0_i32_1 = arith.constant 0 : i32
    return %c0_i32, %c0_i32_0 : i32, i32
  }
  func.func @transform_5(%arg0: i32) -> (i32, i32) {
    %c0_i32 = arith.constant 0 : i32
    %c0_i32_0 = arith.constant 0 : i32
    %c0_i32_1 = arith.constant 0 : i32
    return %c0_i32, %c0_i32_0 : i32, i32
  }
  func.func @transform_6(%arg0: i32) -> (i32, i32) {
    %c0_i32 = arith.constant 0 : i32
    %c0_i32_0 = arith.constant 0 : i32
    %c0_i32_1 = arith.constant 0 : i32
    return %c0_i32, %c0_i32_0 : i32, i32
  }
  func.func @transform_7(%arg0: i32) -> (i32, i32) {
    %c0_i32 = arith.constant 0 : i32
    %c0_i32_0 = arith.constant 0 : i32
    %c0_i32_1 = arith.constant 0 : i32
    return %c0_i32, %c0_i32_0 : i32, i32
  }
  func.func @transform_8(%arg0: i32) -> (i32, i32) {
    %c0_i32 = arith.constant 0 : i32
    %c0_i32_0 = arith.constant 0 : i32
    return %arg0, %c0_i32 : i32, i32
  }
}

</mosaic_0001>

<llo_original>
// kernel: tpu_custom_call.1
$region0: #{tpu_custom_call.1}
  #allocation0 [shape = 'u32[]', space=smem, size = 0x4, offset = 0x4, fixed_abs, tag = 'smem constant byte address 0x4 - core index']
  #allocation1 [shape = 'u32[144,128]{1,0:T(1,128)}', space=vmem, size = 0x12000, scoped, tag = 'internal scratch']
  #allocation2 [shape = 'f32[1,1]{1,0:T(1,128)S(6)}', space=smem, size = 0x200, scoped, tag = 'scoped memory for tpu_custom_call.1']
  %s0 = inlined_call_operand.hbm [shape: f32[2,8,32], index: 0, kind: input, shape index: {}]
  %s1 = inlined_call_operand.hbm [shape: f32[2,8], index: 1, kind: input, shape index: {}]
  %s2 = inlined_call_operand.hbm [shape: bf16[32,32], index: 2, kind: input, shape index: {}]
  %s3 = inlined_call_operand.hbm [shape: f32[1,32], index: 3, kind: input, shape index: {}]
  %s4 = inlined_call_operand.hbm [shape: f32[1,32], index: 4, kind: input, shape index: {}]
  %s5 = inlined_call_operand.<no memory space> [shape: f32[1,1], index: 5, kind: input, shape index: {}]
  %s6 = inlined_call_operand.hbm [shape: bf16[32,64], index: 6, kind: input, shape index: {}]
  %s7 = inlined_call_operand.hbm [shape: f32[1,64], index: 7, kind: input, shape index: {}]
  %s8 = inlined_call_operand.hbm [shape: f32[2,64], index: 8, kind: output, shape index: {}]
  %s9 = sld [smem:[#allocation0]]
  $region70: #{tpu_custom_call.1} parent=0
    _
  %s11 = ssub.s32 1, %s9
  %s12 = scalar_select 0, %s11, %s9
  %13 = sst [smem:[#allocation2]] %s5
  $region1: #{tpu_custom_call.1} parent=0
    #allocation3 [shape = 'u8[8192]{0}', space=vmem, size = 0x2000, scoped, tag = 'input window, operand 0, single buffered']
    #allocation4 [shape = 's32[1]{0}', space=sflag, size = 0x4, scoped, tag = 'scoped memory for tpu_custom_call.1']
    #allocation5 [shape = 's32[1]{0}', space=sflag, size = 0x4, scoped, tag = 'scoped memory for tpu_custom_call.1']
    #allocation6 [shape = 'u8[1024]{0}', space=vmem, size = 0x400, scoped, tag = 'input window, operand 1, single buffered']
    #allocation7 [shape = 's32[1]{0}', space=sflag, size = 0x4, scoped, tag = 'scoped memory for tpu_custom_call.1']
    #allocation8 [shape = 'u8[8192]{0}', space=vmem, size = 0x2000, scoped, tag = 'input window, operand 2, single buffered']
    #allocation9 [shape = 'u8[512]{0}', space=vmem, size = 0x400, scoped, tag = 'input window, operand 3, single buffered']
    #allocation10 [shape = 's32[1]{0}', space=sflag, size = 0x4, scoped, tag = 'scoped memory for tpu_custom_call.1']
    #allocation11 [shape = 'u8[512]{0}', space=vmem, size = 0x400, scoped, tag = 'input window, operand 4, single buffered']
    #allocation12 [shape = 'u8[8192]{0}', space=vmem, size = 0x2000, scoped, tag = 'input window, operand 6, single buffered']
    #allocation13 [shape = 's32[1]{0}', space=sflag, size = 0x4, scoped, tag = 'scoped memory for tpu_custom_call.1']
    #allocation14 [shape = 'u8[512]{0}', space=vmem, size = 0x400, scoped, tag = 'input window, operand 7, single buffered']
    #allocation15 [shape = 'u8[1024]{0}', space=vmem, size = 0x400, scoped, tag = 'output window, operand 0, single buffered']
    %14 = vsyncpa [#allocation4], 0
    %15 = vsyncpa [#allocation7], 0
    %16 = vsyncpa [#allocation10], 0
    %17 = vsyncpa [#allocation13], 0
    %18 = vsyncpa [#allocation5], 0
    // Predicated region
    $region2: #{tpu_custom_call.1} parent=1 // pred_check
      _
    $region3: #{tpu_custom_call.1} parent=1 // pred_check_branch
      %20 = sbr.rel (0) target = $region5
    $region4: #{tpu_custom_call.1} parent=1 // pred_region
      %s22 = ssub.s32 256, 256
      %23 = vsyncadd [#allocation4], %s22
      %s24 = sshll.u32 [#allocation3], 4
      %s25 = int_to_ptr.vmem [resolvable:$true] %s24
      %30 = dma.hbm_to_vmem [thread:$0]  %s0, 256, %s25, [#allocation4], 128, 128, 8
    $region5: #{tpu_custom_call.1} parent=1 // pred_fallthru
      _
    // Predicated region
    $region6: #{tpu_custom_call.1} parent=1 // pred_check
      _
    $region7: #{tpu_custom_call.1} parent=1 // pred_check_branch
      %32 = sbr.rel (0) target = $region9
    $region8: #{tpu_custom_call.1} parent=1 // pred_region
      %s34 = ssub.s32 32, 32
      %35 = vsyncadd [#allocation7], %s34
      %s37 = sshll.u32 [#allocation6], 4
      %s38 = int_to_ptr.vmem [resolvable:$true] %s37
      %40 = dma.hbm_to_vmem [thread:$0]  %s1, 32, %s38, [#allocation7]
    $region9: #{tpu_custom_call.1} parent=1 // pred_fallthru
      _
    // Predicated region
    $region10: #{tpu_custom_call.1} parent=1 // pred_check
      _
    $region11: #{tpu_custom_call.1} parent=1 // pred_check_branch
      %42 = sbr.rel (0) target = $region13
    $region12: #{tpu_custom_call.1} parent=1 // pred_region
      %s44 = ssub.s32 256, 256
      %45 = vsyncadd [#allocation7], %s44
      %s46 = sshll.u32 [#allocation8], 4
      %s47 = int_to_ptr.vmem [resolvable:$true] %s46
      %52 = dma.hbm_to_vmem [thread:$0]  %s2, 256, %s47, [#allocation7], 64, 64, 4
    $region13: #{tpu_custom_call.1} parent=1 // pred_fallthru
      _
    // Predicated region
    $region14: #{tpu_custom_call.1} parent=1 // pred_check
      _
    $region15: #{tpu_custom_call.1} parent=1 // pred_check_branch
      %54 = sbr.rel (0) target = $region17
    $region16: #{tpu_custom_call.1} parent=1 // pred_region
      %s56 = ssub.s32 16, 16
      %57 = vsyncadd [#allocation10], %s56
      %s59 = sshll.u32 [#allocation9], 4
      %s60 = int_to_ptr.vmem [resolvable:$true] %s59
      %62 = dma.hbm_to_vmem [thread:$0]  %s3, 16, %s60, [#allocation10]
    $region17: #{tpu_custom_call.1} parent=1 // pred_fallthru
      _
    // Predicated region
    $region18: #{tpu_custom_call.1} parent=1 // pred_check
      _
    $region19: #{tpu_custom_call.1} parent=1 // pred_check_branch
      %64 = sbr.rel (0) target = $region21
    $region20: #{tpu_custom_call.1} parent=1 // pred_region
      %s66 = ssub.s32 16, 16
      %67 = vsyncadd [#allocation10], %s66
      %s69 = sshll.u32 [#allocation11], 4
      %s70 = int_to_ptr.vmem [resolvable:$true] %s69
      %72 = dma.hbm_to_vmem [thread:$0]  %s4, 16, %s70, [#allocation10]
    $region21: #{tpu_custom_call.1} parent=1 // pred_fallthru
      _
    // Predicated region
    $region22: #{tpu_custom_call.1} parent=1 // pred_check
      _
    $region23: #{tpu_custom_call.1} parent=1 // pred_check_branch
      %74 = sbr.rel (0) target = $region25
    $region24: #{tpu_custom_call.1} parent=1 // pred_region
      _
    $region25: #{tpu_custom_call.1} parent=1 // pred_fallthru
      _
    // Predicated region
    $region26: #{tpu_custom_call.1} parent=1 // pred_check
      _
    $region27: #{tpu_custom_call.1} parent=1 // pred_check_branch
      %76 = sbr.rel (0) target = $region29
    $region28: #{tpu_custom_call.1} parent=1 // pred_region
      %s78 = ssub.s32 256, 256
      %79 = vsyncadd [#allocation13], %s78
      %s80 = sshll.u32 [#allocation12], 4
      %s81 = int_to_ptr.vmem [resolvable:$true] %s80
      %86 = dma.hbm_to_vmem [thread:$0]  %s6, 256, %s81, [#allocation13], 64, 64, 4
    $region29: #{tpu_custom_call.1} parent=1 // pred_fallthru
      _
    // Predicated region
    $region30: #{tpu_custom_call.1} parent=1 // pred_check
      _
    $region31: #{tpu_custom_call.1} parent=1 // pred_check_branch
      %88 = sbr.rel (0) target = $region33
    $region32: #{tpu_custom_call.1} parent=1 // pred_region
      %s90 = ssub.s32 16, 16
      %91 = vsyncadd [#allocation13], %s90
      %s93 = sshll.u32 [#allocation14], 4
      %s94 = int_to_ptr.vmem [resolvable:$true] %s93
      %96 = dma.hbm_to_vmem [thread:$0]  %s7, 16, %s94, [#allocation13]
    $region33: #{tpu_custom_call.1} parent=1 // pred_fallthru
      _
    // Predicated region
    $region34: #{tpu_custom_call.1} parent=1 // pred_check
      _
    $region35: #{tpu_custom_call.1} parent=1 // pred_check_branch
      %98 = sbr.rel (0) target = $region37
    $region36: #{tpu_custom_call.1} parent=1 // pred_region
      %99 = dma.done [#allocation4], 256
    $region37: #{tpu_custom_call.1} parent=1 // pred_fallthru
      _
    // Predicated region
    $region38: #{tpu_custom_call.1} parent=1 // pred_check
      _
    $region39: #{tpu_custom_call.1} parent=1 // pred_check_branch
      %101 = sbr.rel (0) target = $region41
    $region40: #{tpu_custom_call.1} parent=1 // pred_region
      %102 = dma.done [#allocation7], 32
    $region41: #{tpu_custom_call.1} parent=1 // pred_fallthru
      _
    // Predicated region
    $region42: #{tpu_custom_call.1} parent=1 // pred_check
      _
    $region43: #{tpu_custom_call.1} parent=1 // pred_check_branch
      %104 = sbr.rel (0) target = $region45
    $region44: #{tpu_custom_call.1} parent=1 // pred_region
      %105 = dma.done [#allocation7], 256
    $region45: #{tpu_custom_call.1} parent=1 // pred_fallthru
      _
    // Predicated region
    $region46: #{tpu_custom_call.1} parent=1 // pred_check
      _
    $region47: #{tpu_custom_call.1} parent=1 // pred_check_branch
      %107 = sbr.rel (0) target = $region49
    $region48: #{tpu_custom_call.1} parent=1 // pred_region
      %108 = dma.done [#allocation10], 16
    $region49: #{tpu_custom_call.1} parent=1 // pred_fallthru
      _
    // Predicated region
    $region50: #{tpu_custom_call.1} parent=1 // pred_check
      _
    $region51: #{tpu_custom_call.1} parent=1 // pred_check_branch
      %110 = sbr.rel (0) target = $region53
    $region52: #{tpu_custom_call.1} parent=1 // pred_region
      %111 = dma.done [#allocation10], 16
    $region53: #{tpu_custom_call.1} parent=1 // pred_fallthru
      _
    // Predicated region
    $region54: #{tpu_custom_call.1} parent=1 // pred_check
      _
    $region55: #{tpu_custom_call.1} parent=1 // pred_check_branch
      %113 = sbr.rel (0) target = $region57
    $region56: #{tpu_custom_call.1} parent=1 // pred_region
      %114 = dma.done [#allocation13], 256
    $region57: #{tpu_custom_call.1} parent=1 // pred_fallthru
      _
    // Predicated region
    $region58: #{tpu_custom_call.1} parent=1 // pred_check
      _
    $region59: #{tpu_custom_call.1} parent=1 // pred_check_branch
      %116 = sbr.rel (0) target = $region61
    $region60: #{tpu_custom_call.1} parent=1 // pred_region
      %117 = dma.done [#allocation13], 16
    $region61: #{tpu_custom_call.1} parent=1 // pred_fallthru
      _
    %v119 = vld [vmem:[#allocation3] sm:$0xff]
    %v120 = vld [vmem:[#allocation3 + $0x8] sm:$0xff]
    %v121 = vpack.c.bf16 %v120, %v119
    %v122 = vld [vmem:[#allocation8] sm:$0xf]
    %v123 = vld [vmem:[#allocation8 + $0x4] sm:$0xf]
    %v124 = vld [vmem:[#allocation8 + $0x8] sm:$0xf]
    %v125 = vld [vmem:[#allocation8 + $0xc] sm:$0xf]
    %v126 = vld [vmem:[#allocation9] sm:$0x1]
    %v128 = vlaneseq
    %v129 = vshrl.u32 %v128, 7
    %v130 = vsub.s32 0, %v129
    %v131 = vrot.slane %v126, %v130
    %v137 = vunpack.c.l.b16 %v122
    %v138 = vunpack.c.l.b16 %v123
    %v139 = vunpack.c.l.b16 %v124
    %v140 = vunpack.c.l.b16 %v125
    %v141 = vpack.c.b16 %v138, %v137
    %v142 = vpack.c.b16 %v140, %v139
    %vm145 = vcmask 261120
    %v147 = vsel %vm145, %v121, 0
    %149 = vmatprep.subr.bf16.mxu0 0
    %150 = vmatpush1.bf16.msra.mxu0 %v141
    %151 = vmatprep.subr.bf16.mxu0 0
    %152 = vmatpush1.bf16.msra.mxu0 %v142
    %153 = vmatprep.subr.bf16.mxu0 0
    %154 = vmatpush1.bf16.msra.mxu0 0
    %155 = vmatprep.subr.bf16.mxu0 0
    %156 = vmatpush1.bf16.msra.mxu0 0
    %157 = vmatprep.subr.bf16.mxu0 0
    %158 = vmatpush1.bf16.msra.mxu0 0
    %159 = vmatprep.subr.bf16.mxu0 0
    %160 = vmatpush1.bf16.msra.mxu0 0
    %161 = vmatprep.subr.bf16.mxu0 0
    %162 = vmatpush1.bf16.msra.mxu0 0
    %163 = vmatprep.subr.bf16.mxu0 0
    %164 = vmatpush1.bf16.msra.mxu0 0
    %165 = vmatprep.subr.bf16.mxu0 0
    %166 = vmatpush1.bf16.msra.mxu0 0
    %167 = vmatprep.subr.bf16.mxu0 0
    %168 = vmatpush1.bf16.msra.mxu0 0
    %169 = vmatprep.subr.bf16.mxu0 0
    %170 = vmatpush1.bf16.msra.mxu0 0
    %171 = vmatprep.subr.bf16.mxu0 0
    %172 = vmatpush1.bf16.msra.mxu0 0
    %173 = vmatprep.subr.bf16.mxu0 0
    %174 = vmatpush1.bf16.msra.mxu0 0
    %175 = vmatprep.subr.bf16.mxu0 0
    %176 = vmatpush1.bf16.msra.mxu0 0
    %177 = vmatprep.subr.bf16.mxu0 0
    %178 = vmatpush1.bf16.msra.mxu0 0
    %179 = vmatprep.subr.bf16.mxu0 0
    %180 = vmatpush1.bf16.msra.mxu0 0
    %181 = vmatprep.mubr.bf16.mxu0 0
    %182 = vmatmul.mubr.bf16.gmra.mrb[0].mxu0 %v147
    %v183 = vpop.f32.mrb[0].mxu0
    %v184 = vadd.f32 %v131, %v183
    %v185 = vpop.f32.mrb[0].mxu0
    %v186 = vpop.f32.mrb[0].mxu0
    %v187 = vadd.f32 %v131, %v186
    %v188 = vpop.f32.mrb[0].mxu0
    %189 = vdwg.mxu0
    %v190 = vpack.c.bf16 %v184, %v184
    %v191 = vpack.c.bf16 %v187, %v187
    %v192 = vtanh.bf16.pop %v190
    %v193 = vtanh.bf16.pop %v191
    %v194 = vld [vmem:[#allocation11] sm:$0x1]
    %v195 = vunpack.c.l.bf16 %v192
    %v196 = vunpack.c.l.bf16 %v193
    %v198 = vlaneseq
    %v199 = vshrl.u32 %v198, 7
    %v200 = vsub.s32 0, %v199
    %v201 = vrot.slane %v194, %v200
    %v203 = vmul.f32 %v195, %v201
    %v204 = vmul.f32 %v196, %v201
    %v205 = vsel %vm145, %v203, 0.0
    %206 = vadd.xlane.f32.xlu0 %v205
    %v207 = vpop.xlane.xlu0 %206
    %v208 = vsel %vm145, %v204, 0.0
    %209 = vadd.xlane.f32.xlu0 %v208
    %v210 = vpop.xlane.xlu0 %209
    %s211 = sld [smem:[#allocation2]]
    %v212 = vstv %s211
    %v213 = vadd.f32 %v207, %v212
    %v214 = vadd.f32 %v210, %v212
    %v215 = vld [vmem:[#allocation6] sm:$0x3]
    %vm216 = vcmp.gt.f32.partialorder %v215, 0.0
    %v219 = vlaneseq
    %v220 = vand.u32 %v219, 127
    %v221 = vlaneseq
    %v222 = vshrl.u32 %v221, 7
    %v223 = vsub.s32 %v220, %v222
    %v224 = vrot.slane %v213, %v223
    %v225 = vlaneseq
    %v226 = vshrl.u32 %v225, 7
    %v227 = vsub.s32 %v220, %v226
    %v228 = vrot.slane %v214, %v227
    %vm229 = vcmask 1041409
    %v230 = vsel %vm229, %v228, %v224
    %v232 = vsel %vm216, %v230, -1e+20
    %vm233 = vcmask 58368
    %v234 = vsel %vm233, %v232, -inf
    %235 = vmax.xlane.f32.xlu0 %v234
    %v236 = vpop.xlane.xlu0 %235
    %v237 = vsub.f32 %v232, %v236
    %v238 = vmul.f32 %v237, 1.442695
    %v239 = vpow.pop %v238
    %v240 = vsel %vm233, %v239, 0.0
    %241 = vadd.xlane.f32.xlu0 %v240
    %v242 = vpop.xlane.xlu0 %241
    %v243 = vrcp.pop %v242
    %v244 = vmul.f32 %v239, %v243
    %v245 = vlaneseq
    %v246 = vshrl.u32 %v245, 7
    %v247 = vsub.s32 0, %v246
    %v248 = vrot.slane %v244, %v247
    %250 = vbcast.lane.b32.xlu0 %v248, 256
    %v251 = vpop.permute.xlu0 %250
    %v252 = vlaneseq
    %v253 = vshrl.u32 %v252, 7
    %v254 = vsub.s32 1, %v253
    %v255 = vrot.slane %v244, %v254
    %257 = vbcast.lane.b32.xlu0 %v255, 256
    %v258 = vpop.permute.xlu0 %257
    %v259 = vmul.f32 %v251, %v119
    %v260 = vmul.f32 %v258, %v120
    %v261 = vsel %vm145, %v259, 0.0
    %v262 = vrot.slane %v261, 4
    %v263 = vadd.f32 %v261, %v262
    %v264 = vrot.slane %v263, 2
    %v265 = vadd.f32 %v263, %v264
    %v266 = vrot.slane %v265, 1
    %v267 = vadd.f32 %v265, %v266
    %v268 = vsel %vm145, %v260, 0.0
    %v269 = vrot.slane %v268, 4
    %v270 = vadd.f32 %v268, %v269
    %v271 = vrot.slane %v270, 2
    %v272 = vadd.f32 %v270, %v271
    %v273 = vrot.slane %v272, 1
    %v274 = vadd.f32 %v272, %v273
    %v275 = vpack.c.bf16 %v267, %v267
    %v276 = vpack.c.bf16 %v274, %v274
    %v277 = vld [vmem:[#allocation12] sm:$0xf]
    %v278 = vld [vmem:[#allocation12 + $0x4] sm:$0xf]
    %v279 = vld [vmem:[#allocation12 + $0x8] sm:$0xf]
    %v280 = vld [vmem:[#allocation12 + $0xc] sm:$0xf]
    %v281 = vld [vmem:[#allocation14] sm:$0x1]
    %v283 = vlaneseq
    %v284 = vshrl.u32 %v283, 7
    %v285 = vsub.s32 0, %v284
    %v286 = vrot.slane %v281, %v285
    %v290 = vunpack.c.l.b16 %v275
    %v291 = vunpack.c.l.b16 %v276
    %v292 = vsel %vm229, %v291, %v290
    %v293 = vpack.c.b16 %v292, %v292
    %v298 = vunpack.c.l.b16 %v277
    %v299 = vunpack.c.l.b16 %v278
    %v300 = vunpack.c.l.b16 %v279
    %v301 = vunpack.c.l.b16 %v280
    %v302 = vpack.c.b16 %v299, %v298
    %v303 = vpack.c.b16 %v301, %v300
    %v307 = vsel %vm145, %v293, 0
    %309 = vmatprep.subr.bf16.mxu0 0
    %310 = vmatpush1.bf16.msra.mxu0 %v302
    %311 = vmatprep.subr.bf16.mxu0 0
    %312 = vmatpush1.bf16.msra.mxu0 %v303
    %313 = vmatprep.subr.bf16.mxu0 0
    %314 = vmatpush1.bf16.msra.mxu0 0
    %315 = vmatprep.subr.bf16.mxu0 0
    %316 = vmatpush1.bf16.msra.mxu0 0
    %317 = vmatprep.subr.bf16.mxu0 0
    %318 = vmatpush1.bf16.msra.mxu0 0
    %319 = vmatprep.subr.bf16.mxu0 0
    %320 = vmatpush1.bf16.msra.mxu0 0
    %321 = vmatprep.subr.bf16.mxu0 0
    %322 = vmatpush1.bf16.msra.mxu0 0
    %323 = vmatprep.subr.bf16.mxu0 0
    %324 = vmatpush1.bf16.msra.mxu0 0
    %325 = vmatprep.subr.bf16.mxu0 0
    %326 = vmatpush1.bf16.msra.mxu0 0
    %327 = vmatprep.subr.bf16.mxu0 0
    %328 = vmatpush1.bf16.msra.mxu0 0
    %329 = vmatprep.subr.bf16.mxu0 0
    %330 = vmatpush1.bf16.msra.mxu0 0
    %331 = vmatprep.subr.bf16.mxu0 0
    %332 = vmatpush1.bf16.msra.mxu0 0
    %333 = vmatprep.subr.bf16.mxu0 0
    %334 = vmatpush1.bf16.msra.mxu0 0
    %335 = vmatprep.subr.bf16.mxu0 0
    %336 = vmatpush1.bf16.msra.mxu0 0
    %337 = vmatprep.subr.bf16.mxu0 0
    %338 = vmatpush1.bf16.msra.mxu0 0
    %339 = vmatprep.subr.bf16.mxu0 0
    %340 = vmatpush1.bf16.msra.mxu0 0
    %341 = vmatprep.mubr.bf16.mxu0 0
    %342 = vmatmul.mubr.bf16.gmra.mrb[0].mxu0 %v307
    %v343 = vpop.f32.mrb[0].mxu0
    %v344 = vadd.f32 %v286, %v343
    %v345 = vpop.f32.mrb[0].mxu0
    %v346 = vpop.f32.mrb[0].mxu0
    %v347 = vpop.f32.mrb[0].mxu0
    %348 = vdwg.mxu0
    %v349 = vtanh.pop %v344
    %vm350 = vcmask 517120
    %351 = vst.msk [vmem:[#allocation15] sm:$0x3] %vm350, %v349
    // Predicated region
    $region62: #{tpu_custom_call.1} parent=1 // pred_check
      _
    $region63: #{tpu_custom_call.1} parent=1 // pred_check_branch
      %353 = sbr.rel (0) target = $region65
    $region64: #{tpu_custom_call.1} parent=1 // pred_region
      %s355 = ssub.s32 32, 32
      %356 = vsyncadd [#allocation5], %s355
      %s358 = sshll.u32 [#allocation15], 4
      %s359 = int_to_ptr.vmem [resolvable:$true] %s358
      %361 = dma.vmem_to_hbm [thread:$0]  %s359, 32, %s8, [#allocation5]
    $region65: #{tpu_custom_call.1} parent=1 // pred_fallthru
      _
    // Predicated region
    $region66: #{tpu_custom_call.1} parent=1 // pred_check
      _
    $region67: #{tpu_custom_call.1} parent=1 // pred_check_branch
      %363 = sbr.rel (0) target = $region69
    $region68: #{tpu_custom_call.1} parent=1 // pred_region
      %364 = dma.done [#allocation5], 32
    $region69: #{tpu_custom_call.1} parent=1 // pred_fallthru
      _
    %365 = vsyncpa [#allocation4], 1
    %366 = vsyncpa [#allocation7], 1
    %367 = vsyncpa [#allocation10], 1
    %368 = vsyncpa [#allocation13], 1
    %369 = vsyncpa [#allocation5], 1

// kernel: tpu_custom_call.1
$region0: #{tpu_custom_call.1}
  #allocation0 [shape = 'u32[]', space=smem, size = 0x4, offset = 0x4, fixed_abs, tag = 'smem constant byte address 0x4 - core index']
  #allocation1 [shape = 'u32[144,128]{1,0:T(1,128)}', space=vmem, size = 0x12000, scoped, tag = 'internal scratch']
  #allocation2 [shape = 'f32[1,1]{1,0:T(1,128)S(6)}', space=smem, size = 0x200, scoped, tag = 'scoped memory for tpu_custom_call.1']
  %s0 = inlined_call_operand.hbm [shape: f32[2,8,32], index: 0, kind: input, shape index: {}]
  %s1 = inlined_call_operand.hbm [shape: f32[2,8], index: 1, kind: input, shape index: {}]
  %s2 = inlined_call_operand.hbm [shape: bf16[32,32], index: 2, kind: input, shape index: {}]
  %s3 = inlined_call_operand.hbm [shape: f32[1,32], index: 3, kind: input, shape index: {}]
  %s4 = inlined_call_operand.hbm [shape: f32[1,32], index: 4, kind: input, shape index: {}]
  %s5 = inlined_call_operand.<no memory space> [shape: f32[1,1], index: 5, kind: input, shape index: {}]
  %s6 = inlined_call_operand.hbm [shape: bf16[32,64], index: 6, kind: input, shape index: {}]
  %s7 = inlined_call_operand.hbm [shape: f32[1,64], index: 7, kind: input, shape index: {}]
  %s8 = inlined_call_operand.hbm [shape: f32[2,64], index: 8, kind: output, shape index: {}]
  %s9 = sld [smem:[#allocation0]]
  $region70: #{tpu_custom_call.1} parent=0
    _
  %s11 = ssub.s32 1, %s9
  %s12 = scalar_select 0, %s11, %s9
  %13 = sst [smem:[#allocation2]] %s5
  $region1: #{tpu_custom_call.1} parent=0
    #allocation3 [shape = 'u8[8192]{0}', space=vmem, size = 0x2000, scoped, tag = 'input window, operand 0, single buffered']
    #allocation4 [shape = 's32[1]{0}', space=sflag, size = 0x4, scoped, tag = 'scoped memory for tpu_custom_call.1']
    #allocation5 [shape = 's32[1]{0}', space=sflag, size = 0x4, scoped, tag = 'scoped memory for tpu_custom_call.1']
    #allocation6 [shape = 'u8[1024]{0}', space=vmem, size = 0x400, scoped, tag = 'input window, operand 1, single buffered']
    #allocation7 [shape = 's32[1]{0}', space=sflag, size = 0x4, scoped, tag = 'scoped memory for tpu_custom_call.1']
    #allocation8 [shape = 'u8[8192]{0}', space=vmem, size = 0x2000, scoped, tag = 'input window, operand 2, single buffered']
    #allocation9 [shape = 'u8[512]{0}', space=vmem, size = 0x400, scoped, tag = 'input window, operand 3, single buffered']
    #allocation10 [shape = 's32[1]{0}', space=sflag, size = 0x4, scoped, tag = 'scoped memory for tpu_custom_call.1']
    #allocation11 [shape = 'u8[512]{0}', space=vmem, size = 0x400, scoped, tag = 'input window, operand 4, single buffered']
    #allocation12 [shape = 'u8[8192]{0}', space=vmem, size = 0x2000, scoped, tag = 'input window, operand 6, single buffered']
    #allocation13 [shape = 's32[1]{0}', space=sflag, size = 0x4, scoped, tag = 'scoped memory for tpu_custom_call.1']
    #allocation14 [shape = 'u8[512]{0}', space=vmem, size = 0x400, scoped, tag = 'input window, operand 7, single buffered']
    #allocation15 [shape = 'u8[1024]{0}', space=vmem, size = 0x400, scoped, tag = 'output window, operand 0, single buffered']
    %14 = vsyncpa [#allocation4], 0
    %15 = vsyncpa [#allocation7], 0
    %16 = vsyncpa [#allocation10], 0
    %17 = vsyncpa [#allocation13], 0
    %18 = vsyncpa [#allocation5], 0
    // Predicated region
    $region2: #{tpu_custom_call.1} parent=1 // pred_check
      _
    $region3: #{tpu_custom_call.1} parent=1 // pred_check_branch
      %20 = sbr.rel (0) target = $region5
    $region4: #{tpu_custom_call.1} parent=1 // pred_region
      %s22 = ssub.s32 256, 256
      %23 = vsyncadd [#allocation4], %s22
      %s24 = sshll.u32 [#allocation3], 4
      %s25 = int_to_ptr.vmem [resolvable:$true] %s24
      %30 = dma.hbm_to_vmem [thread:$0]  %s0, 256, %s25, [#allocation4], 128, 128, 8
    $region5: #{tpu_custom_call.1} parent=1 // pred_fallthru
      _
    // Predicated region
    $region6: #{tpu_custom_call.1} parent=1 // pred_check
      _
    $region7: #{tpu_custom_call.1} parent=1 // pred_check_branch
      %32 = sbr.rel (0) target = $region9
    $region8: #{tpu_custom_call.1} parent=1 // pred_region
      %s34 = ssub.s32 32, 32
      %35 = vsyncadd [#allocation7], %s34
      %s37 = sshll.u32 [#allocation6], 4
      %s38 = int_to_ptr.vmem [resolvable:$true] %s37
      %40 = dma.hbm_to_vmem [thread:$0]  %s1, 32, %s38, [#allocation7]
    $region9: #{tpu_custom_call.1} parent=1 // pred_fallthru
      _
    // Predicated region
    $region10: #{tpu_custom_call.1} parent=1 // pred_check
      _
    $region11: #{tpu_custom_call.1} parent=1 // pred_check_branch
      %42 = sbr.rel (0) target = $region13
    $region12: #{tpu_custom_call.1} parent=1 // pred_region
      %s44 = ssub.s32 256, 256
      %45 = vsyncadd [#allocation7], %s44
      %s46 = sshll.u32 [#allocation8], 4
      %s47 = int_to_ptr.vmem [resolvable:$true] %s46
      %52 = dma.hbm_to_vmem [thread:$0]  %s2, 256, %s47, [#allocation7], 64, 64, 4
    $region13: #{tpu_custom_call.1} parent=1 // pred_fallthru
      _
    // Predicated region
    $region14: #{tpu_custom_call.1} parent=1 // pred_check
      _
    $region15: #{tpu_custom_call.1} parent=1 // pred_check_branch
      %54 = sbr.rel (0) target = $region17
    $region16: #{tpu_custom_call.1} parent=1 // pred_region
      %s56 = ssub.s32 16, 16
      %57 = vsyncadd [#allocation10], %s56
      %s59 = sshll.u32 [#allocation9], 4
      %s60 = int_to_ptr.vmem [resolvable:$true] %s59
      %62 = dma.hbm_to_vmem [thread:$0]  %s3, 16, %s60, [#allocation10]
    $region17: #{tpu_custom_call.1} parent=1 // pred_fallthru
      _
    // Predicated region
    $region18: #{tpu_custom_call.1} parent=1 // pred_check
      _
    $region19: #{tpu_custom_call.1} parent=1 // pred_check_branch
      %64 = sbr.rel (0) target = $region21
    $region20: #{tpu_custom_call.1} parent=1 // pred_region
      %s66 = ssub.s32 16, 16
      %67 = vsyncadd [#allocation10], %s66
      %s69 = sshll.u32 [#allocation11], 4
      %s70 = int_to_ptr.vmem [resolvable:$true] %s69
      %72 = dma.hbm_to_vmem [thread:$0]  %s4, 16, %s70, [#allocation10]
    $region21: #{tpu_custom_call.1} parent=1 // pred_fallthru
      _
    // Predicated region
    $region22: #{tpu_custom_call.1} parent=1 // pred_check
      _
    $region23: #{tpu_custom_call.1} parent=1 // pred_check_branch
      %74 = sbr.rel (0) target = $region25
    $region24: #{tpu_custom_call.1} parent=1 // pred_region
      _
    $region25: #{tpu_custom_call.1} parent=1 // pred_fallthru
      _
    // Predicated region
    $region26: #{tpu_custom_call.1} parent=1 // pred_check
      _
    $region27: #{tpu_custom_call.1} parent=1 // pred_check_branch
      %76 = sbr.rel (0) target = $region29
    $region28: #{tpu_custom_call.1} parent=1 // pred_region
      %s78 = ssub.s32 256, 256
      %79 = vsyncadd [#allocation13], %s78
      %s80 = sshll.u32 [#allocation12], 4
      %s81 = int_to_ptr.vmem [resolvable:$true] %s80
      %86 = dma.hbm_to_vmem [thread:$0]  %s6, 256, %s81, [#allocation13], 64, 64, 4
    $region29: #{tpu_custom_call.1} parent=1 // pred_fallthru
      _
    // Predicated region
    $region30: #{tpu_custom_call.1} parent=1 // pred_check
      _
    $region31: #{tpu_custom_call.1} parent=1 // pred_check_branch
      %88 = sbr.rel (0) target = $region33
    $region32: #{tpu_custom_call.1} parent=1 // pred_region
      %s90 = ssub.s32 16, 16
      %91 = vsyncadd [#allocation13], %s90
      %s93 = sshll.u32 [#allocation14], 4
      %s94 = int_to_ptr.vmem [resolvable:$true] %s93
      %96 = dma.hbm_to_vmem [thread:$0]  %s7, 16, %s94, [#allocation13]
    $region33: #{tpu_custom_call.1} parent=1 // pred_fallthru
      _
    // Predicated region
    $region34: #{tpu_custom_call.1} parent=1 // pred_check
      _
    $region35: #{tpu_custom_call.1} parent=1 // pred_check_branch
      %98 = sbr.rel (0) target = $region37
    $region36: #{tpu_custom_call.1} parent=1 // pred_region
      %99 = dma.done [#allocation4], 256
    $region37: #{tpu_custom_call.1} parent=1 // pred_fallthru
      _
    // Predicated region
    $region38: #{tpu_custom_call.1} parent=1 // pred_check
      _
    $region39: #{tpu_custom_call.1} parent=1 // pred_check_branch
      %101 = sbr.rel (0) target = $region41
    $region40: #{tpu_custom_call.1} parent=1 // pred_region
      %102 = dma.done [#allocation7], 32
    $region41: #{tpu_custom_call.1} parent=1 // pred_fallthru
      _
    // Predicated region
    $region42: #{tpu_custom_call.1} parent=1 // pred_check
      _
    $region43: #{tpu_custom_call.1} parent=1 // pred_check_branch
      %104 = sbr.rel (0) target = $region45
    $region44: #{tpu_custom_call.1} parent=1 // pred_region
      %105 = dma.done [#allocation7], 256
    $region45: #{tpu_custom_call.1} parent=1 // pred_fallthru
      _
    // Predicated region
    $region46: #{tpu_custom_call.1} parent=1 // pred_check
      _
    $region47: #{tpu_custom_call.1} parent=1 // pred_check_branch
      %107 = sbr.rel (0) target = $region49
    $region48: #{tpu_custom_call.1} parent=1 // pred_region
      %108 = dma.done [#allocation10], 16
    $region49: #{tpu_custom_call.1} parent=1 // pred_fallthru
      _
    // Predicated region
    $region50: #{tpu_custom_call.1} parent=1 // pred_check
      _
    $region51: #{tpu_custom_call.1} parent=1 // pred_check_branch
      %110 = sbr.rel (0) target = $region53
    $region52: #{tpu_custom_call.1} parent=1 // pred_region
      %111 = dma.done [#allocation10], 16
    $region53: #{tpu_custom_call.1} parent=1 // pred_fallthru
      _
    // Predicated region
    $region54: #{tpu_custom_call.1} parent=1 // pred_check
      _
    $region55: #{tpu_custom_call.1} parent=1 // pred_check_branch
      %113 = sbr.rel (0) target = $region57
    $region56: #{tpu_custom_call.1} parent=1 // pred_region
      %114 = dma.done [#allocation13], 256
    $region57: #{tpu_custom_call.1} parent=1 // pred_fallthru
      _
    // Predicated region
    $region58: #{tpu_custom_call.1} parent=1 // pred_check
      _
    $region59: #{tpu_custom_call.1} parent=1 // pred_check_branch
      %116 = sbr.rel (0) target = $region61
    $region60: #{tpu_custom_call.1} parent=1 // pred_region
      %117 = dma.done [#allocation13], 16
    $region61: #{tpu_custom_call.1} parent=1 // pred_fallthru
      _
    %v119 = vld [vmem:[#allocation3] sm:$0xff]
    %v120 = vld [vmem:[#allocation3 + $0x8] sm:$0xff]
    %v121 = vpack.c.bf16 %v120, %v119
    %v122 = vld [vmem:[#allocation8] sm:$0xf]
    %v123 = vld [vmem:[#allocation8 + $0x4] sm:$0xf]
    %v124 = vld [vmem:[#allocation8 + $0x8] sm:$0xf]
    %v125 = vld [vmem:[#allocation8 + $0xc] sm:$0xf]
    %v126 = vld [vmem:[#allocation9] sm:$0x1]
    %v128 = vlaneseq
    %v129 = vshrl.u32 %v128, 7
    %v130 = vsub.s32 0, %v129
    %v131 = vrot.slane %v126, %v130
    %v137 = vunpack.c.l.b16 %v122
    %v138 = vunpack.c.l.b16 %v123
    %v139 = vunpack.c.l.b16 %v124
    %v140 = vunpack.c.l.b16 %v125
    %v141 = vpack.c.b16 %v138, %v137
    %v142 = vpack.c.b16 %v140, %v139
    %vm145 = vcmask 261120
    %v147 = vsel %vm145, %v121, 0
    %149 = vmatprep.subr.bf16.mxu0 0
    %150 = vmatpush1.bf16.msra.mxu0 %v141
    %151 = vmatprep.subr.bf16.mxu0 0
    %152 = vmatpush1.bf16.msra.mxu0 %v142
    %153 = vmatprep.subr.bf16.mxu0 0
    %154 = vmatpush1.bf16.msra.mxu0 0
    %155 = vmatprep.subr.bf16.mxu0 0
    %156 = vmatpush1.bf16.msra.mxu0 0
    %157 = vmatprep.subr.bf16.mxu0 0
    %158 = vmatpush1.bf16.msra.mxu0 0
    %159 = vmatprep.subr.bf16.mxu0 0
    %160 = vmatpush1.bf16.msra.mxu0 0
    %161 = vmatprep.subr.bf16.mxu0 0
    %162 = vmatpush1.bf16.msra.mxu0 0
    %163 = vmatprep.subr.bf16.mxu0 0
    %164 = vmatpush1.bf16.msra.mxu0 0
    %165 = vmatprep.subr.bf16.mxu0 0
    %166 = vmatpush1.bf16.msra.mxu0 0
    %167 = vmatprep.subr.bf16.mxu0 0
    %168 = vmatpush1.bf16.msra.mxu0 0
    %169 = vmatprep.subr.bf16.mxu0 0
    %170 = vmatpush1.bf16.msra.mxu0 0
    %171 = vmatprep.subr.bf16.mxu0 0
    %172 = vmatpush1.bf16.msra.mxu0 0
    %173 = vmatprep.subr.bf16.mxu0 0
    %174 = vmatpush1.bf16.msra.mxu0 0
    %175 = vmatprep.subr.bf16.mxu0 0
    %176 = vmatpush1.bf16.msra.mxu0 0
    %177 = vmatprep.subr.bf16.mxu0 0
    %178 = vmatpush1.bf16.msra.mxu0 0
    %179 = vmatprep.subr.bf16.mxu0 0
    %180 = vmatpush1.bf16.msra.mxu0 0
    %181 = vmatprep.mubr.bf16.mxu0 0
    %182 = vmatmul.mubr.bf16.gmra.mrb[0].mxu0 %v147
    %v183 = vpop.f32.mrb[0].mxu0
    %v184 = vadd.f32 %v131, %v183
    %v185 = vpop.f32.mrb[0].mxu0
    %v186 = vpop.f32.mrb[0].mxu0
    %v187 = vadd.f32 %v131, %v186
    %v188 = vpop.f32.mrb[0].mxu0
    %189 = vdwg.mxu0
    %v190 = vpack.c.bf16 %v184, %v184
    %v191 = vpack.c.bf16 %v187, %v187
    %v192 = vtanh.bf16.pop %v190
    %v193 = vtanh.bf16.pop %v191
    %v194 = vld [vmem:[#allocation11] sm:$0x1]
    %v195 = vunpack.c.l.bf16 %v192
    %v196 = vunpack.c.l.bf16 %v193
    %v198 = vlaneseq
    %v199 = vshrl.u32 %v198, 7
    %v200 = vsub.s32 0, %v199
    %v201 = vrot.slane %v194, %v200
    %v203 = vmul.f32 %v195, %v201
    %v204 = vmul.f32 %v196, %v201
    %v205 = vsel %vm145, %v203, 0.0
    %206 = vadd.xlane.f32.xlu0 %v205
    %v207 = vpop.xlane.xlu0 %206
    %v208 = vsel %vm145, %v204, 0.0
    %209 = vadd.xlane.f32.xlu0 %v208
    %v210 = vpop.xlane.xlu0 %209
    %s211 = sld [smem:[#allocation2]]
    %v212 = vstv %s211
    %v213 = vadd.f32 %v207, %v212
    %v214 = vadd.f32 %v210, %v212
    %v215 = vld [vmem:[#allocation6] sm:$0x3]
    %vm216 = vcmp.gt.f32.partialorder %v215, 0.0
    %v219 = vlaneseq
    %v220 = vand.u32 %v219, 127
    %v221 = vlaneseq
    %v222 = vshrl.u32 %v221, 7
    %v223 = vsub.s32 %v220, %v222
    %v224 = vrot.slane %v213, %v223
    %v225 = vlaneseq
    %v226 = vshrl.u32 %v225, 7
    %v227 = vsub.s32 %v220, %v226
    %v228 = vrot.slane %v214, %v227
    %vm229 = vcmask 1041409
    %v230 = vsel %vm229, %v228, %v224
    %v232 = vsel %vm216, %v230, -1e+20
    %vm233 = vcmask 58368
    %v234 = vsel %vm233, %v232, -inf
    %235 = vmax.xlane.f32.xlu0 %v234
    %v236 = vpop.xlane.xlu0 %235
    %v237 = vsub.f32 %v232, %v236
    %v238 = vmul.f32 %v237, 1.442695
    %v239 = vpow.pop %v238
    %v240 = vsel %vm233, %v239, 0.0
    %241 = vadd.xlane.f32.xlu0 %v240
    %v242 = vpop.xlane.xlu0 %241
    %v243 = vrcp.pop %v242
    %v244 = vmul.f32 %v239, %v243
    %v245 = vlaneseq
    %v246 = vshrl.u32 %v245, 7
    %v247 = vsub.s32 0, %v246
    %v248 = vrot.slane %v244, %v247
    %250 = vbcast.lane.b32.xlu0 %v248, 256
    %v251 = vpop.permute.xlu0 %250
    %v252 = vlaneseq
    %v253 = vshrl.u32 %v252, 7
    %v254 = vsub.s32 1, %v253
    %v255 = vrot.slane %v244, %v254
    %257 = vbcast.lane.b32.xlu0 %v255, 256
    %v258 = vpop.permute.xlu0 %257
    %v259 = vmul.f32 %v251, %v119
    %v260 = vmul.f32 %v258, %v120
    %v261 = vsel %vm145, %v259, 0.0
    %v262 = vrot.slane %v261, 4
    %v263 = vadd.f32 %v261, %v262
    %v264 = vrot.slane %v263, 2
    %v265 = vadd.f32 %v263, %v264
    %v266 = vrot.slane %v265, 1
    %v267 = vadd.f32 %v265, %v266
    %v268 = vsel %vm145, %v260, 0.0
    %v269 = vrot.slane %v268, 4
    %v270 = vadd.f32 %v268, %v269
    %v271 = vrot.slane %v270, 2
    %v272 = vadd.f32 %v270, %v271
    %v273 = vrot.slane %v272, 1
    %v274 = vadd.f32 %v272, %v273
    %v275 = vpack.c.bf16 %v267, %v267
    %v276 = vpack.c.bf16 %v274, %v274
    %v277 = vld [vmem:[#allocation12] sm:$0xf]
    %v278 = vld [vmem:[#allocation12 + $0x4] sm:$0xf]
    %v279 = vld [vmem:[#allocation12 + $0x8] sm:$0xf]
    %v280 = vld [vmem:[#allocation12 + $0xc] sm:$0xf]
    %v281 = vld [vmem:[#allocation14] sm:$0x1]
    %v283 = vlaneseq
    %v284 = vshrl.u32 %v283, 7
    %v285 = vsub.s32 0, %v284
    %v286 = vrot.slane %v281, %v285
    %v290 = vunpack.c.l.b16 %v275
    %v291 = vunpack.c.l.b16 %v276
    %v292 = vsel %vm229, %v291, %v290
    %v293 = vpack.c.b16 %v292, %v292
    %v298 = vunpack.c.l.b16 %v277
    %v299 = vunpack.c.l.b16 %v278
    %v300 = vunpack.c.l.b16 %v279
    %v301 = vunpack.c.l.b16 %v280
    %v302 = vpack.c.b16 %v299, %v298
    %v303 = vpack.c.b16 %v301, %v300
    %v307 = vsel %vm145, %v293, 0
    %309 = vmatprep.subr.bf16.mxu0 0
    %310 = vmatpush1.bf16.msra.mxu0 %v302
    %311 = vmatprep.subr.bf16.mxu0 0
    %312 = vmatpush1.bf16.msra.mxu0 %v303
    %313 = vmatprep.subr.bf16.mxu0 0
    %314 = vmatpush1.bf16.msra.mxu0 0
    %315 = vmatprep.subr.bf16.mxu0 0
    %316 = vmatpush1.bf16.msra.mxu0 0
    %317 = vmatprep.subr.bf16.mxu0 0
    %318 = vmatpush1.bf16.msra.mxu0 0
    %319 = vmatprep.subr.bf16.mxu0 0
    %320 = vmatpush1.bf16.msra.mxu0 0
    %321 = vmatprep.subr.bf16.mxu0 0
    %322 = vmatpush1.bf16.msra.mxu0 0
    %323 = vmatprep.subr.bf16.mxu0 0
    %324 = vmatpush1.bf16.msra.mxu0 0
    %325 = vmatprep.subr.bf16.mxu0 0
    %326 = vmatpush1.bf16.msra.mxu0 0
    %327 = vmatprep.subr.bf16.mxu0 0
    %328 = vmatpush1.bf16.msra.mxu0 0
    %329 = vmatprep.subr.bf16.mxu0 0
    %330 = vmatpush1.bf16.msra.mxu0 0
    %331 = vmatprep.subr.bf16.mxu0 0
    %332 = vmatpush1.bf16.msra.mxu0 0
    %333 = vmatprep.subr.bf16.mxu0 0
    %334 = vmatpush1.bf16.msra.mxu0 0
    %335 = vmatprep.subr.bf16.mxu0 0
    %336 = vmatpush1.bf16.msra.mxu0 0
    %337 = vmatprep.subr.bf16.mxu0 0
    %338 = vmatpush1.bf16.msra.mxu0 0
    %339 = vmatprep.subr.bf16.mxu0 0
    %340 = vmatpush1.bf16.msra.mxu0 0
    %341 = vmatprep.mubr.bf16.mxu0 0
    %342 = vmatmul.mubr.bf16.gmra.mrb[0].mxu0 %v307
    %v343 = vpop.f32.mrb[0].mxu0
    %v344 = vadd.f32 %v286, %v343
    %v345 = vpop.f32.mrb[0].mxu0
    %v346 = vpop.f32.mrb[0].mxu0
    %v347 = vpop.f32.mrb[0].mxu0
    %348 = vdwg.mxu0
    %v349 = vtanh.pop %v344
    %vm350 = vcmask 517120
    %351 = vst.msk [vmem:[#allocation15] sm:$0x3] %vm350, %v349
    // Predicated region
    $region62: #{tpu_custom_call.1} parent=1 // pred_check
      _
    $region63: #{tpu_custom_call.1} parent=1 // pred_check_branch
      %353 = sbr.rel (0) target = $region65
    $region64: #{tpu_custom_call.1} parent=1 // pred_region
      %s355 = ssub.s32 32, 32
      %356 = vsyncadd [#allocation5], %s355
      %s358 = sshll.u32 [#allocation15], 4
      %s359 = int_to_ptr.vmem [resolvable:$true] %s358
      %361 = dma.vmem_to_hbm [thread:$0]  %s359, 32, %s8, [#allocation5]
    $region65: #{tpu_custom_call.1} parent=1 // pred_fallthru
      _
    // Predicated region
    $region66: #{tpu_custom_call.1} parent=1 // pred_check
      _
    $region67: #{tpu_custom_call.1} parent=1 // pred_check_branch
      %363 = sbr.rel (0) target = $region69
    $region68: #{tpu_custom_call.1} parent=1 // pred_region
      %364 = dma.done [#allocation5], 32
    $region69: #{tpu_custom_call.1} parent=1 // pred_fallthru
      _
    %365 = vsyncpa [#allocation4], 1
    %366 = vsyncpa [#allocation7], 1
    %367 = vsyncpa [#allocation10], 1
    %368 = vsyncpa [#allocation13], 1
    %369 = vsyncpa [#allocation5], 1

</llo_original>
